<compile_context>
chip_gen: v7x
topology: tpu7x:2x2x1
jax: 0.10.0
libtpu: 0.0.40
codegen_flags: <defaults>
</compile_context>

<pallas_src>
import functools

import jax
import jax.numpy as jnp
from jax import lax
from jax.experimental import pallas as pl
from jax.experimental.pallas import tpu as pltpu


def _round_up(x, m):
    return ((x + m - 1) // m) * m


def _cdiv(a, b):
    return -(-a // b)


def _num_tensorcores_per_chip():
    # v7x has 2 TensorCores per chip (grid axes marked "parallel" shard across
    # them); v5e/v6e have 1. Best-effort detection — default to 1 on failure.
    try:
        kind = jax.devices()[0].device_kind.lower()
        if "v7" in kind:
            return 2
    except Exception:
        pass
    return 1


# ---------------------------------------------------------------------------
# Path A: table resident in VMEM, gather expressed as one-hot matmul (MXU).
# ---------------------------------------------------------------------------
def _onehot_matmul_kernel(ids_ref, table_ref, out_ref, *, precision):
    # ids_ref  : VMEM (TB, 1) int32      -- class ids for this batch tile
    # table_ref: VMEM (Npad, Dpad)       -- zero-padded table (single-buffered)
    # out_ref  : VMEM (TB, Dpad)         -- lane-dense output tile
    tb = out_ref.shape[0]
    n_pad = table_ref.shape[0]

    ids = ids_ref[...]                                          # (TB, 1) int32
    class_iota = lax.broadcasted_iota(jnp.int32, (tb, n_pad), 1)
    one_hot = (class_iota == ids).astype(table_ref.dtype)       # (TB, Npad)

    # Gather-as-matmul; exact for a 0/1 one-hot (precision pinned for f32).
    out_ref[...] = jnp.dot(
        one_hot,
        table_ref[...],
        preferred_element_type=jnp.float32,
        precision=precision,
    ).astype(out_ref.dtype)


# ---------------------------------------------------------------------------
# Path B: large-table fallback — per-row DMA gather straight from HBM.
# ---------------------------------------------------------------------------
_ROWS_PER_GATHER_STEP = 8


def _row_dma_gather_kernel(ids_ref, table_ref, out_ref, sems):
    # ids_ref : SMEM (Bpad,) int32  (scalar-prefetched)
    # table_ref: HBM (N, D)         (memory_space=pl.ANY, never copied whole)
    # out_ref : VMEM (ROWS, D) output tile
    i = pl.program_id(0)
    rows = out_ref.shape[0]
    # Issue all row DMAs for this tile, then wait on all of them.
    for r in range(rows):
        row = ids_ref[i * rows + r]
        pltpu.make_async_copy(
            table_ref.at[pl.ds(row, 1), :],
            out_ref.at[pl.ds(r, 1), :],
            sems.at[r],
        ).start()
    for r in range(rows):
        row = ids_ref[i * rows + r]
        pltpu.make_async_copy(
            table_ref.at[pl.ds(row, 1), :],
            out_ref.at[pl.ds(r, 1), :],
            sems.at[r],
        ).wait()


def _gather_forward(ids_padded, table):
    b_pad = ids_padded.shape[0]
    n_classes, embed_dim = table.shape
    itemsize = jnp.dtype(table.dtype).itemsize
    cost = pl.CostEstimate(
        flops=0,
        transcendentals=0,
        bytes_accessed=b_pad * 4 + 2 * b_pad * embed_dim * itemsize,
    )
    return pl.pallas_call(
        _row_dma_gather_kernel,
        out_shape=jax.ShapeDtypeStruct((b_pad, embed_dim), table.dtype),
        grid_spec=pltpu.PrefetchScalarGridSpec(
            num_scalar_prefetch=1,
            grid=(b_pad // _ROWS_PER_GATHER_STEP,),
            in_specs=[pl.BlockSpec(memory_space=pl.ANY)],
            out_specs=pl.BlockSpec(
                (_ROWS_PER_GATHER_STEP, embed_dim), lambda i, ids: (i, 0)
            ),
            scratch_shapes=[pltpu.SemaphoreType.DMA((_ROWS_PER_GATHER_STEP,))],
        ),
        compiler_params=pltpu.CompilerParams(
            dimension_semantics=("arbitrary",),
        ),
        cost_estimate=cost,
    )(ids_padded, table)


# ---------------------------------------------------------------------------
# Module wrapper (mirrors ClassEmbedder.forward).
# ---------------------------------------------------------------------------
class ClassEmbedderPallas:
    """Pallas TPU equivalent of ClassEmbedder (embedding lookup)."""

    # Keep the table resident in VMEM while comfortably under the smallest
    # scoped-VMEM budget in the fleet; above this, use the row-DMA gather.
    _VMEM_TABLE_BYTES_THRESHOLD = 12 * 1024 * 1024

    def __init__(self, table, add_sequence_dim=False):
        self.n_classes, self.embed_dim = table.shape
        self.add_sequence_dim = add_sequence_dim
        self.table = table  # raw table (used by the DMA-gather fallback)

        # Hoisted, one-time padding (not in the per-call forward path):
        # contraction dim -> multiple of 128, embed dim -> multiple of 128
        # (lane-dense output stores).
        n_pad = _round_up(self.n_classes, 128)
        d_pad = _round_up(self.embed_dim, 128)
        if (n_pad, d_pad) != table.shape:
            self.table_padded = jnp.pad(
                table, ((0, n_pad - self.n_classes), (0, d_pad - self.embed_dim))
            )
        else:
            self.table_padded = table

        itemsize = jnp.dtype(table.dtype).itemsize
        self._table_bytes = n_pad * d_pad * itemsize
        # Exact row reconstruction for f32 tables; bf16/int tables are already
        # fed natively to the MXU.
        self._precision = (
            lax.Precision.HIGHEST if table.dtype == jnp.float32
            else lax.Precision.DEFAULT
        )

    def __call__(self, ids, force_gather=False):
        B = ids.shape[0]
        # Clamp: dynamic VMEM/DMA access has no bounds check, so out-of-range
        # ids would silently read garbage (nn.Embedding would error instead).
        ids = jnp.clip(ids.astype(jnp.int32), 0, self.n_classes - 1)

        use_gather = (
            force_gather
            or self._table_bytes > self._VMEM_TABLE_BYTES_THRESHOLD
            or (self.n_classes > 8192 and self.n_classes > 64 * B)
        )
        if use_gather:
            b_pad = _round_up(max(B, 1), _ROWS_PER_GATHER_STEP)
            ids_p = jnp.pad(ids, (0, b_pad - B))
            out = _gather_forward(ids_p, self.table)
        else:
            out = self._matmul_forward(ids, B)

        out = out[:B, : self.embed_dim]
        if self.add_sequence_dim:
            out = out[:, None, :]
        return out

    def _matmul_forward(self, ids, B):
        n_pad, d_pad = self.table_padded.shape
        itemsize = jnp.dtype(self.table_padded.dtype).itemsize

        # Per-batch-row VMEM cost: double-buffered out block + f32 one-hot
        # temp + f32 accumulator + ids. Budget sized against v5e's 16 MiB
        # default scoped limit with the table single-buffered.
        per_row_bytes = 2 * d_pad * itemsize + n_pad * 4 + d_pad * 4 + 8
        budget = 12 * 1024 * 1024
        tb_cap = max(8, ((budget - self._table_bytes) // per_row_bytes // 8) * 8)

        # Fewest possible tiles (per-step overhead dominates), but split the
        # batch across TensorCores when there is more than one (v7x).
        n_splits = _num_tensorcores_per_chip()
        tb = _round_up(_cdiv(max(B, 1), n_splits), 8)
        tb = min(tb, tb_cap)
        b_pad = _round_up(B, tb)
        ids2d = jnp.pad(ids, (0, b_pad - B)).reshape(b_pad, 1)

        cost = pl.CostEstimate(
            flops=2 * b_pad * n_pad * d_pad,
            transcendentals=0,
            bytes_accessed=(
                b_pad * 4 + n_pad * d_pad * itemsize + b_pad * d_pad * itemsize
            ),
        )
        vmem_need = 2 * self._table_bytes + 2 * tb * per_row_bytes + (2 << 20)
        vmem_limit = int(min(max(vmem_need, 16 << 20), 48 << 20))

        # Constant index_map -> nothing to double-buffer for the table.
        try:
            table_spec = pl.BlockSpec(
                (n_pad, d_pad), lambda i: (0, 0), pipeline_mode=pl.Buffered(1)
            )
        except (TypeError, ValueError):
            table_spec = pl.BlockSpec((n_pad, d_pad), lambda i: (0, 0))

        kernel = functools.partial(_onehot_matmul_kernel, precision=self._precision)
        return pl.pallas_call(
            kernel,
            out_shape=jax.ShapeDtypeStruct((b_pad, d_pad), self.table_padded.dtype),
            grid_spec=pltpu.PrefetchScalarGridSpec(
                num_scalar_prefetch=0,
                grid=(b_pad // tb,),
                in_specs=[
                    pl.BlockSpec((tb, 1), lambda i: (i, 0)),
                    table_spec,
                ],
                out_specs=pl.BlockSpec((tb, d_pad), lambda i: (i, 0)),
            ),
            compiler_params=pltpu.CompilerParams(
                dimension_semantics=("parallel",),
                vmem_limit_bytes=vmem_limit,
            ),
            cost_estimate=cost,
        )(ids2d, self.table_padded)


# TODO(synk): ucg_rate / get_unconditional_conditioning are host-side config
# (no tensor compute) and are not expressed as kernels.


if __name__ == "__main__":
    # Small shapes consistent with the module: n_classes=16, embed_dim=32, batch=8.
    n_classes = 16
    embed_dim = 32
    batch = 8

    key = jax.random.PRNGKey(0)
    k_table, k_ids = jax.random.split(key)

    # nn.Embedding default init: weights ~ N(0, 1)
    table = jax.random.normal(k_table, (n_classes, embed_dim), dtype=jnp.float32)
    ids = jax.random.randint(k_ids, (batch,), 0, n_classes, dtype=jnp.int32)

    embedder = ClassEmbedderPallas(table, add_sequence_dim=False)
    embedder_seq = ClassEmbedderPallas(table, add_sequence_dim=True)

    out = embedder(ids)
    out_seq = embedder_seq(ids)
    jax.block_until_ready(out)
    jax.block_until_ready(out_seq)

    ref = jnp.take(table, ids, axis=0)
    assert out.shape == (batch, embed_dim)
    assert out_seq.shape == (batch, 1, embed_dim)
    assert jnp.allclose(out, ref), "kernel output mismatch vs reference gather"
    assert jnp.allclose(out_seq[:, 0, :], ref), "sequence-dim output mismatch"

    # Ragged / larger batch path (exercises tiling + padding without asserts).
    ids_big = jax.random.randint(jax.random.PRNGKey(1), (37,), 0, n_classes, jnp.int32)
    out_big = embedder(ids_big)
    jax.block_until_ready(out_big)
    assert out_big.shape == (37, embed_dim)
    assert jnp.allclose(out_big, jnp.take(table, ids_big, axis=0)), "ragged batch mismatch"

    # Large-table fallback path (per-row DMA gather) exercised explicitly.
    out_g = embedder(ids, force_gather=True)
    jax.block_until_ready(out_g)
    assert jnp.allclose(out_g, ref), "DMA-gather path mismatch"

    print("KERNEL_OK")
</pallas_src>

<mosaic_0001>
module attributes {stable_mosaic.version = 11 : i64} {
  func.func @_onehot_matmul_kernel(%arg0: i32, %arg1: memref<8x1xi32, #tpu.memory_space<vmem>>, %arg2: memref<128x128xf32, #tpu.memory_space<vmem>>, %arg3: memref<8x128xf32, #tpu.memory_space<vmem>>) attributes {dimension_semantics = [#tpu.dimension_semantics<parallel>], iteration_bounds = array<i64: 1>, scalar_prefetch = 0 : i64, scratch_operands = 0 : i64, tpu.core_type = #tpu.core_type<tc>, window_params = [{transform_indices = @transform_0, window_bounds = array<i64: 8, 1>}, {pipeline_mode = #tpu.pipeline_mode<synchronous>, transform_indices = @transform_1, window_bounds = array<i64: 128, 128>}, {transform_indices = @transform_2, window_bounds = array<i64: 8, 128>}]} {
    %c0 = arith.constant 0 : index
    %c0_0 = arith.constant 0 : index
    %0 = vector.load %arg1[%c0, %c0_0] : memref<8x1xi32, #tpu.memory_space<vmem>>, vector<8x1xi32>
    %1 = tpu.iota {dimensions = array<i32: 1>} : vector<8x128xi32>
    %2 = vector.broadcast %0 : vector<8x1xi32> to vector<8x128xi32>
    %3 = arith.cmpi eq, %1, %2 : vector<8x128xi32>
    %4 = arith.extui %3 : vector<8x128xi1> to vector<8x128xi32>
    %5 = arith.sitofp %4 : vector<8x128xi32> to vector<8x128xf32>
    %c0_1 = arith.constant 0 : index
    %c0_2 = arith.constant 0 : index
    %6 = vector.load %arg2[%c0_1, %c0_2] : memref<128x128xf32, #tpu.memory_space<vmem>>, vector<128x128xf32>
    %cst = arith.constant dense<0.000000e+00> : vector<8x128xf32>
    %7 = tpu.matmul %5, %6, %cst {dimension_numbers = #tpu.dot_dimension_numbers<[1], [0], [0], [1], [0, 0, 1, 1], [], []>, precision = #tpu.contract_precision<fp32>} : vector<8x128xf32>, vector<128x128xf32>, vector<8x128xf32> -> vector<8x128xf32>
    %c0_3 = arith.constant 0 : index
    %c0_4 = arith.constant 0 : index
    %8 = vector.load %arg3[%c0_3, %c0_4] : memref<8x128xf32, #tpu.memory_space<vmem>>, vector<8x128xf32>
    tpu.vector_store %arg3[%c0_3, %c0_4], %7 {strides = array<i32>} : memref<8x128xf32, #tpu.memory_space<vmem>>, vector<8x128xf32>,
    return
  }
  func.func @transform_0(%arg0: i32) -> (i32, i32) {
    %c0_i32 = arith.constant 0 : i32
    %c0_i32_0 = arith.constant 0 : i32
    return %arg0, %c0_i32 : i32, i32
  }
  func.func @transform_1(%arg0: i32) -> (i32, i32) {
    %c0_i32 = arith.constant 0 : i32
    %c0_i32_0 = arith.constant 0 : i32
    %c0_i32_1 = arith.constant 0 : i32
    return %c0_i32, %c0_i32_0 : i32, i32
  }
  func.func @transform_2(%arg0: i32) -> (i32, i32) {
    %c0_i32 = arith.constant 0 : i32
    %c0_i32_0 = arith.constant 0 : i32
    return %arg0, %c0_i32 : i32, i32
  }
}

</mosaic_0001>

<llo_original>
// kernel: tpu_custom_call.1
$region0: #{tpu_custom_call.1}
  #allocation0 [shape = 'u32[]', space=smem, size = 0x4, offset = 0x4, fixed_abs, tag = 'smem constant byte address 0x4 - core index']
  #allocation1 [shape = 'u32[144,128]{1,0:T(1,128)}', space=vmem, size = 0x12000, scoped, tag = 'internal scratch']
  %s0 = inlined_call_operand.vmem [shape: s32[8,1], index: 0, kind: input, shape index: {}]
  %s1 = inlined_call_operand.hbm [shape: f32[128,128], index: 1, kind: input, shape index: {}]
  %s2 = inlined_call_operand.hbm [shape: f32[8,128], index: 2, kind: output, shape index: {}]
  %s3 = sld [smem:[#allocation0]]
  $region22: #{tpu_custom_call.1} parent=0
    _
  %s5 = ssub.s32 1, %s3
  %s6 = scalar_select 0, %s5, %s3
  $region1: #{tpu_custom_call.1} parent=0
    #allocation2 [shape = 'u8[65536]{0}', space=vmem, size = 0x10000, scoped, tag = 'input window, operand 1, single buffered']
    #allocation3 [shape = 's32[1]{0}', space=sflag, size = 0x4, scoped, tag = 'scoped memory for tpu_custom_call.1']
    #allocation4 [shape = 's32[1]{0}', space=sflag, size = 0x4, scoped, tag = 'scoped memory for tpu_custom_call.1']
    #allocation5 [shape = 'u8[4096]{0}', space=vmem, size = 0x1000, scoped, tag = 'output window, operand 0, single buffered']
    %7 = vsyncpa [#allocation3], 0
    %8 = vsyncpa [#allocation4], 0
    // Predicated region
    $region2: #{tpu_custom_call.1} parent=1 // pred_check
      _
    $region3: #{tpu_custom_call.1} parent=1 // pred_check_branch
      %10 = sbr.rel (0) target = $region5
    $region4: #{tpu_custom_call.1} parent=1 // pred_region
      _
    $region5: #{tpu_custom_call.1} parent=1 // pred_fallthru
      _
    // Predicated region
    $region6: #{tpu_custom_call.1} parent=1 // pred_check
      _
    $region7: #{tpu_custom_call.1} parent=1 // pred_check_branch
      %12 = sbr.rel (0) target = $region9
    $region8: #{tpu_custom_call.1} parent=1 // pred_region
      %s14 = ssub.s32 2048, 2048
      %15 = vsyncadd [#allocation3], %s14
      %s16 = sshll.u32 [#allocation2], 4
      %s17 = int_to_ptr.vmem [resolvable:$true] %s16
      %22 = dma.hbm_to_vmem [thread:$0]  %s1, 2048, %s17, [#allocation3], 128, 128, 8
    $region9: #{tpu_custom_call.1} parent=1 // pred_fallthru
      _
    // Predicated region
    $region10: #{tpu_custom_call.1} parent=1 // pred_check
      _
    $region11: #{tpu_custom_call.1} parent=1 // pred_check_branch
      %24 = sbr.rel (0) target = $region13
    $region12: #{tpu_custom_call.1} parent=1 // pred_region
      %25 = dma.done [#allocation3], 2048
    $region13: #{tpu_custom_call.1} parent=1 // pred_fallthru
      _
    %v26 = vld [vmem:[%s0] sm:$0xff]
    %v27 = vlaneseq
    %v28 = vand.u32 %v27, 127
    %29 = vset.pattern.permute.xlu0 0
    %30 = vperm.xlu0 %29, %v26
    %v31 = vpop.permute.xlu0 %30
    %vm32 = vcmp.eq.s32.totalorder %v28, %v31
    %v33 = vsel %vm32, 1, 0
    %v34 = vcvt.s32.f32 %v33
    %v35 = vld [vmem:[#allocation2] sm:$0xff]
    %v36 = vld [vmem:[#allocation2 + $0x8] sm:$0xff]
    %v37 = vld [vmem:[#allocation2 + $0x10] sm:$0xff]
    %v38 = vld [vmem:[#allocation2 + $0x18] sm:$0xff]
    %v39 = vld [vmem:[#allocation2 + $0x20] sm:$0xff]
    %v40 = vld [vmem:[#allocation2 + $0x28] sm:$0xff]
    %v41 = vld [vmem:[#allocation2 + $0x30] sm:$0xff]
    %v42 = vld [vmem:[#allocation2 + $0x38] sm:$0xff]
    %v43 = vld [vmem:[#allocation2 + $0x40] sm:$0xff]
    %v44 = vld [vmem:[#allocation2 + $0x48] sm:$0xff]
    %v45 = vld [vmem:[#allocation2 + $0x50] sm:$0xff]
    %v46 = vld [vmem:[#allocation2 + $0x58] sm:$0xff]
    %v47 = vld [vmem:[#allocation2 + $0x60] sm:$0xff]
    %v48 = vld [vmem:[#allocation2 + $0x68] sm:$0xff]
    %v49 = vld [vmem:[#allocation2 + $0x70] sm:$0xff]
    %v50 = vld [vmem:[#allocation2 + $0x78] sm:$0xff]
    %51 = vmatprep.subr.mxu0 0.0
    %v52 = vand.u32 %v35, 4294901760
    %53 = vmatpush1.msra.mxu0 %v52
    %54 = vmatprep.subr.mxu0 0.0
    %v55 = vand.u32 %v36, 4294901760
    %56 = vmatpush1.msra.mxu0 %v55
    %57 = vmatprep.subr.mxu0 0.0
    %v58 = vand.u32 %v37, 4294901760
    %59 = vmatpush1.msra.mxu0 %v58
    %60 = vmatprep.subr.mxu0 0.0
    %v61 = vand.u32 %v38, 4294901760
    %62 = vmatpush1.msra.mxu0 %v61
    %63 = vmatprep.subr.mxu0 0.0
    %v64 = vand.u32 %v39, 4294901760
    %65 = vmatpush1.msra.mxu0 %v64
    %66 = vmatprep.subr.mxu0 0.0
    %v67 = vand.u32 %v40, 4294901760
    %68 = vmatpush1.msra.mxu0 %v67
    %69 = vmatprep.subr.mxu0 0.0
    %v70 = vand.u32 %v41, 4294901760
    %71 = vmatpush1.msra.mxu0 %v70
    %72 = vmatprep.subr.mxu0 0.0
    %v73 = vand.u32 %v42, 4294901760
    %74 = vmatpush1.msra.mxu0 %v73
    %75 = vmatprep.subr.mxu0 0.0
    %v76 = vand.u32 %v43, 4294901760
    %77 = vmatpush1.msra.mxu0 %v76
    %78 = vmatprep.subr.mxu0 0.0
    %v79 = vand.u32 %v44, 4294901760
    %80 = vmatpush1.msra.mxu0 %v79
    %81 = vmatprep.subr.mxu0 0.0
    %v82 = vand.u32 %v45, 4294901760
    %83 = vmatpush1.msra.mxu0 %v82
    %84 = vmatprep.subr.mxu0 0.0
    %v85 = vand.u32 %v46, 4294901760
    %86 = vmatpush1.msra.mxu0 %v85
    %87 = vmatprep.subr.mxu0 0.0
    %v88 = vand.u32 %v47, 4294901760
    %89 = vmatpush1.msra.mxu0 %v88
    %90 = vmatprep.subr.mxu0 0.0
    %v91 = vand.u32 %v48, 4294901760
    %92 = vmatpush1.msra.mxu0 %v91
    %93 = vmatprep.subr.mxu0 0.0
    %v94 = vand.u32 %v49, 4294901760
    %95 = vmatpush1.msra.mxu0 %v94
    %96 = vmatprep.subr.mxu0 0.0
    %v97 = vand.u32 %v50, 4294901760
    %98 = vmatpush1.msra.mxu0 %v97
    %99 = vmatprep.subr.mxu0 0.0
    %100 = vmatpush1.msra.mxu0 0.0
    %101 = vmatprep.subr.mxu0 0.0
    %102 = vmatpush1.msra.mxu0 0.0
    %103 = vmatprep.subr.mxu0 0.0
    %104 = vmatpush1.msra.mxu0 0.0
    %105 = vmatprep.subr.mxu0 0.0
    %106 = vmatpush1.msra.mxu0 0.0
    %107 = vmatprep.subr.mxu0 0.0
    %108 = vmatpush1.msra.mxu0 0.0
    %109 = vmatprep.subr.mxu0 0.0
    %110 = vmatpush1.msra.mxu0 0.0
    %111 = vmatprep.subr.mxu0 0.0
    %112 = vmatpush1.msra.mxu0 0.0
    %113 = vmatprep.subr.mxu0 0.0
    %114 = vmatpush1.msra.mxu0 0.0
    %115 = vmatprep.subr.mxu0 0.0
    %116 = vmatpush1.msra.mxu0 0.0
    %117 = vmatprep.subr.mxu0 0.0
    %118 = vmatpush1.msra.mxu0 0.0
    %119 = vmatprep.subr.mxu0 0.0
    %120 = vmatpush1.msra.mxu0 0.0
    %121 = vmatprep.subr.mxu0 0.0
    %122 = vmatpush1.msra.mxu0 0.0
    %123 = vmatprep.subr.mxu0 0.0
    %124 = vmatpush1.msra.mxu0 0.0
    %125 = vmatprep.subr.mxu0 0.0
    %126 = vmatpush1.msra.mxu0 0.0
    %127 = vmatprep.subr.mxu0 0.0
    %128 = vmatpush1.msra.mxu0 0.0
    %129 = vmatprep.subr.mxu0 0.0
    %130 = vmatpush1.msra.mxu0 0.0
    %131 = vmatprep.mubr.f32.mxu0 0.0
    %v132 = vand.u32 %v34, 4294901760
    %v133 = vsub.f32 %v34, %v132
    %v134 = vand.u32 %v133, 4294901760
    %v135 = vsub.f32 %v133, %v134
    %v136 = vand.u32 %v135, 4294901760
    %137 = vmatmul.mubr.f32.gmra.mrb[0].mxu0 %v136
    %v138 = vpop.f32.mrb[0].mxu0
    %v139 = vadd.f32 0.0, %v138
    %v140 = vpop.f32.mrb[0].mxu0
    %141 = vdwg.mxu0
    %142 = vmatprep.subr.mxu0 0.0
    %v143 = vand.u32 %v35, 4294901760
    %v144 = vsub.f32 %v35, %v143
    %v145 = vand.u32 %v144, 4294901760
    %v146 = vsub.f32 %v144, %v145
    %v147 = vand.u32 %v146, 4294901760
    %148 = vmatpush1.msra.mxu0 %v147
    %149 = vmatprep.subr.mxu0 0.0
    %v150 = vand.u32 %v36, 4294901760
    %v151 = vsub.f32 %v36, %v150
    %v152 = vand.u32 %v151, 4294901760
    %v153 = vsub.f32 %v151, %v152
    %v154 = vand.u32 %v153, 4294901760
    %155 = vmatpush1.msra.mxu0 %v154
    %156 = vmatprep.subr.mxu0 0.0
    %v157 = vand.u32 %v37, 4294901760
    %v158 = vsub.f32 %v37, %v157
    %v159 = vand.u32 %v158, 4294901760
    %v160 = vsub.f32 %v158, %v159
    %v161 = vand.u32 %v160, 4294901760
    %162 = vmatpush1.msra.mxu0 %v161
    %163 = vmatprep.subr.mxu0 0.0
    %v164 = vand.u32 %v38, 4294901760
    %v165 = vsub.f32 %v38, %v164
    %v166 = vand.u32 %v165, 4294901760
    %v167 = vsub.f32 %v165, %v166
    %v168 = vand.u32 %v167, 4294901760
    %169 = vmatpush1.msra.mxu0 %v168
    %170 = vmatprep.subr.mxu0 0.0
    %v171 = vand.u32 %v39, 4294901760
    %v172 = vsub.f32 %v39, %v171
    %v173 = vand.u32 %v172, 4294901760
    %v174 = vsub.f32 %v172, %v173
    %v175 = vand.u32 %v174, 4294901760
    %176 = vmatpush1.msra.mxu0 %v175
    %177 = vmatprep.subr.mxu0 0.0
    %v178 = vand.u32 %v40, 4294901760
    %v179 = vsub.f32 %v40, %v178
    %v180 = vand.u32 %v179, 4294901760
    %v181 = vsub.f32 %v179, %v180
    %v182 = vand.u32 %v181, 4294901760
    %183 = vmatpush1.msra.mxu0 %v182
    %184 = vmatprep.subr.mxu0 0.0
    %v185 = vand.u32 %v41, 4294901760
    %v186 = vsub.f32 %v41, %v185
    %v187 = vand.u32 %v186, 4294901760
    %v188 = vsub.f32 %v186, %v187
    %v189 = vand.u32 %v188, 4294901760
    %190 = vmatpush1.msra.mxu0 %v189
    %191 = vmatprep.subr.mxu0 0.0
    %v192 = vand.u32 %v42, 4294901760
    %v193 = vsub.f32 %v42, %v192
    %v194 = vand.u32 %v193, 4294901760
    %v195 = vsub.f32 %v193, %v194
    %v196 = vand.u32 %v195, 4294901760
    %197 = vmatpush1.msra.mxu0 %v196
    %198 = vmatprep.subr.mxu0 0.0
    %v199 = vand.u32 %v43, 4294901760
    %v200 = vsub.f32 %v43, %v199
    %v201 = vand.u32 %v200, 4294901760
    %v202 = vsub.f32 %v200, %v201
    %v203 = vand.u32 %v202, 4294901760
    %204 = vmatpush1.msra.mxu0 %v203
    %205 = vmatprep.subr.mxu0 0.0
    %v206 = vand.u32 %v44, 4294901760
    %v207 = vsub.f32 %v44, %v206
    %v208 = vand.u32 %v207, 4294901760
    %v209 = vsub.f32 %v207, %v208
    %v210 = vand.u32 %v209, 4294901760
    %211 = vmatpush1.msra.mxu0 %v210
    %212 = vmatprep.subr.mxu0 0.0
    %v213 = vand.u32 %v45, 4294901760
    %v214 = vsub.f32 %v45, %v213
    %v215 = vand.u32 %v214, 4294901760
    %v216 = vsub.f32 %v214, %v215
    %v217 = vand.u32 %v216, 4294901760
    %218 = vmatpush1.msra.mxu0 %v217
    %219 = vmatprep.subr.mxu0 0.0
    %v220 = vand.u32 %v46, 4294901760
    %v221 = vsub.f32 %v46, %v220
    %v222 = vand.u32 %v221, 4294901760
    %v223 = vsub.f32 %v221, %v222
    %v224 = vand.u32 %v223, 4294901760
    %225 = vmatpush1.msra.mxu0 %v224
    %226 = vmatprep.subr.mxu0 0.0
    %v227 = vand.u32 %v47, 4294901760
    %v228 = vsub.f32 %v47, %v227
    %v229 = vand.u32 %v228, 4294901760
    %v230 = vsub.f32 %v228, %v229
    %v231 = vand.u32 %v230, 4294901760
    %232 = vmatpush1.msra.mxu0 %v231
    %233 = vmatprep.subr.mxu0 0.0
    %v234 = vand.u32 %v48, 4294901760
    %v235 = vsub.f32 %v48, %v234
    %v236 = vand.u32 %v235, 4294901760
    %v237 = vsub.f32 %v235, %v236
    %v238 = vand.u32 %v237, 4294901760
    %239 = vmatpush1.msra.mxu0 %v238
    %240 = vmatprep.subr.mxu0 0.0
    %v241 = vand.u32 %v49, 4294901760
    %v242 = vsub.f32 %v49, %v241
    %v243 = vand.u32 %v242, 4294901760
    %v244 = vsub.f32 %v242, %v243
    %v245 = vand.u32 %v244, 4294901760
    %246 = vmatpush1.msra.mxu0 %v245
    %247 = vmatprep.subr.mxu0 0.0
    %v248 = vand.u32 %v50, 4294901760
    %v249 = vsub.f32 %v50, %v248
    %v250 = vand.u32 %v249, 4294901760
    %v251 = vsub.f32 %v249, %v250
    %v252 = vand.u32 %v251, 4294901760
    %253 = vmatpush1.msra.mxu0 %v252
    %254 = vmatprep.subr.mxu0 0.0
    %255 = vmatpush1.msra.mxu0 0.0
    %256 = vmatprep.subr.mxu0 0.0
    %257 = vmatpush1.msra.mxu0 0.0
    %258 = vmatprep.subr.mxu0 0.0
    %259 = vmatpush1.msra.mxu0 0.0
    %260 = vmatprep.subr.mxu0 0.0
    %261 = vmatpush1.msra.mxu0 0.0
    %262 = vmatprep.subr.mxu0 0.0
    %263 = vmatpush1.msra.mxu0 0.0
    %264 = vmatprep.subr.mxu0 0.0
    %265 = vmatpush1.msra.mxu0 0.0
    %266 = vmatprep.subr.mxu0 0.0
    %267 = vmatpush1.msra.mxu0 0.0
    %268 = vmatprep.subr.mxu0 0.0
    %269 = vmatpush1.msra.mxu0 0.0
    %270 = vmatprep.subr.mxu0 0.0
    %271 = vmatpush1.msra.mxu0 0.0
    %272 = vmatprep.subr.mxu0 0.0
    %273 = vmatpush1.msra.mxu0 0.0
    %274 = vmatprep.subr.mxu0 0.0
    %275 = vmatpush1.msra.mxu0 0.0
    %276 = vmatprep.subr.mxu0 0.0
    %277 = vmatpush1.msra.mxu0 0.0
    %278 = vmatprep.subr.mxu0 0.0
    %279 = vmatpush1.msra.mxu0 0.0
    %280 = vmatprep.subr.mxu0 0.0
    %281 = vmatpush1.msra.mxu0 0.0
    %282 = vmatprep.subr.mxu0 0.0
    %283 = vmatpush1.msra.mxu0 0.0
    %284 = vmatprep.subr.mxu0 0.0
    %285 = vmatpush1.msra.mxu0 0.0
    %286 = vmatprep.mubr.f32.mxu0 0.0
    %v287 = vand.u32 %v34, 4294901760
    %288 = vmatmul.mubr.f32.gmra.mrb[0].mxu0 %v287
    %v289 = vpop.f32.mrb[0].mxu0
    %v290 = vadd.f32 %v139, %v289
    %v291 = vpop.f32.mrb[0].mxu0
    %292 = vdwg.mxu0
    %293 = vmatprep.subr.mxu0 0.0
    %v294 = vand.u32 %v35, 4294901760
    %v295 = vsub.f32 %v35, %v294
    %296 = vmatpush1.msra.mxu0 %v295
    %297 = vmatprep.subr.mxu0 0.0
    %v298 = vand.u32 %v36, 4294901760
    %v299 = vsub.f32 %v36, %v298
    %300 = vmatpush1.msra.mxu0 %v299
    %301 = vmatprep.subr.mxu0 0.0
    %v302 = vand.u32 %v37, 4294901760
    %v303 = vsub.f32 %v37, %v302
    %304 = vmatpush1.msra.mxu0 %v303
    %305 = vmatprep.subr.mxu0 0.0
    %v306 = vand.u32 %v38, 4294901760
    %v307 = vsub.f32 %v38, %v306
    %308 = vmatpush1.msra.mxu0 %v307
    %309 = vmatprep.subr.mxu0 0.0
    %v310 = vand.u32 %v39, 4294901760
    %v311 = vsub.f32 %v39, %v310
    %312 = vmatpush1.msra.mxu0 %v311
    %313 = vmatprep.subr.mxu0 0.0
    %v314 = vand.u32 %v40, 4294901760
    %v315 = vsub.f32 %v40, %v314
    %316 = vmatpush1.msra.mxu0 %v315
    %317 = vmatprep.subr.mxu0 0.0
    %v318 = vand.u32 %v41, 4294901760
    %v319 = vsub.f32 %v41, %v318
    %320 = vmatpush1.msra.mxu0 %v319
    %321 = vmatprep.subr.mxu0 0.0
    %v322 = vand.u32 %v42, 4294901760
    %v323 = vsub.f32 %v42, %v322
    %324 = vmatpush1.msra.mxu0 %v323
    %325 = vmatprep.subr.mxu0 0.0
    %v326 = vand.u32 %v43, 4294901760
    %v327 = vsub.f32 %v43, %v326
    %328 = vmatpush1.msra.mxu0 %v327
    %329 = vmatprep.subr.mxu0 0.0
    %v330 = vand.u32 %v44, 4294901760
    %v331 = vsub.f32 %v44, %v330
    %332 = vmatpush1.msra.mxu0 %v331
    %333 = vmatprep.subr.mxu0 0.0
    %v334 = vand.u32 %v45, 4294901760
    %v335 = vsub.f32 %v45, %v334
    %336 = vmatpush1.msra.mxu0 %v335
    %337 = vmatprep.subr.mxu0 0.0
    %v338 = vand.u32 %v46, 4294901760
    %v339 = vsub.f32 %v46, %v338
    %340 = vmatpush1.msra.mxu0 %v339
    %341 = vmatprep.subr.mxu0 0.0
    %v342 = vand.u32 %v47, 4294901760
    %v343 = vsub.f32 %v47, %v342
    %344 = vmatpush1.msra.mxu0 %v343
    %345 = vmatprep.subr.mxu0 0.0
    %v346 = vand.u32 %v48, 4294901760
    %v347 = vsub.f32 %v48, %v346
    %348 = vmatpush1.msra.mxu0 %v347
    %349 = vmatprep.subr.mxu0 0.0
    %v350 = vand.u32 %v49, 4294901760
    %v351 = vsub.f32 %v49, %v350
    %352 = vmatpush1.msra.mxu0 %v351
    %353 = vmatprep.subr.mxu0 0.0
    %v354 = vand.u32 %v50, 4294901760
    %v355 = vsub.f32 %v50, %v354
    %356 = vmatpush1.msra.mxu0 %v355
    %357 = vmatprep.subr.mxu0 0.0
    %358 = vmatpush1.msra.mxu0 0.0
    %359 = vmatprep.subr.mxu0 0.0
    %360 = vmatpush1.msra.mxu0 0.0
    %361 = vmatprep.subr.mxu0 0.0
    %362 = vmatpush1.msra.mxu0 0.0
    %363 = vmatprep.subr.mxu0 0.0
    %364 = vmatpush1.msra.mxu0 0.0
    %365 = vmatprep.subr.mxu0 0.0
    %366 = vmatpush1.msra.mxu0 0.0
    %367 = vmatprep.subr.mxu0 0.0
    %368 = vmatpush1.msra.mxu0 0.0
    %369 = vmatprep.subr.mxu0 0.0
    %370 = vmatpush1.msra.mxu0 0.0
    %371 = vmatprep.subr.mxu0 0.0
    %372 = vmatpush1.msra.mxu0 0.0
    %373 = vmatprep.subr.mxu0 0.0
    %374 = vmatpush1.msra.mxu0 0.0
    %375 = vmatprep.subr.mxu0 0.0
    %376 = vmatpush1.msra.mxu0 0.0
    %377 = vmatprep.subr.mxu0 0.0
    %378 = vmatpush1.msra.mxu0 0.0
    %379 = vmatprep.subr.mxu0 0.0
    %380 = vmatpush1.msra.mxu0 0.0
    %381 = vmatprep.subr.mxu0 0.0
    %382 = vmatpush1.msra.mxu0 0.0
    %383 = vmatprep.subr.mxu0 0.0
    %384 = vmatpush1.msra.mxu0 0.0
    %385 = vmatprep.subr.mxu0 0.0
    %386 = vmatpush1.msra.mxu0 0.0
    %387 = vmatprep.subr.mxu0 0.0
    %388 = vmatpush1.msra.mxu0 0.0
    %389 = vmatprep.mubr.f32.mxu0 0.0
    %v390 = vand.u32 %v34, 4294901760
    %v391 = vsub.f32 %v34, %v390
    %392 = vmatmul.mubr.f32.gmra.mrb[0].mxu0 %v391
    %v393 = vpop.f32.mrb[0].mxu0
    %v394 = vadd.f32 %v290, %v393
    %v395 = vpop.f32.mrb[0].mxu0
    %396 = vdwg.mxu0
    %397 = vmatprep.subr.mxu0 0.0
    %v398 = vand.u32 %v35, 4294901760
    %399 = vmatpush1.msra.mxu0 %v398
    %400 = vmatprep.subr.mxu0 0.0
    %v401 = vand.u32 %v36, 4294901760
    %402 = vmatpush1.msra.mxu0 %v401
    %403 = vmatprep.subr.mxu0 0.0
    %v404 = vand.u32 %v37, 4294901760
    %405 = vmatpush1.msra.mxu0 %v404
    %406 = vmatprep.subr.mxu0 0.0
    %v407 = vand.u32 %v38, 4294901760
    %408 = vmatpush1.msra.mxu0 %v407
    %409 = vmatprep.subr.mxu0 0.0
    %v410 = vand.u32 %v39, 4294901760
    %411 = vmatpush1.msra.mxu0 %v410
    %412 = vmatprep.subr.mxu0 0.0
    %v413 = vand.u32 %v40, 4294901760
    %414 = vmatpush1.msra.mxu0 %v413
    %415 = vmatprep.subr.mxu0 0.0
    %v416 = vand.u32 %v41, 4294901760
    %417 = vmatpush1.msra.mxu0 %v416
    %418 = vmatprep.subr.mxu0 0.0
    %v419 = vand.u32 %v42, 4294901760
    %420 = vmatpush1.msra.mxu0 %v419
    %421 = vmatprep.subr.mxu0 0.0
    %v422 = vand.u32 %v43, 4294901760
    %423 = vmatpush1.msra.mxu0 %v422
    %424 = vmatprep.subr.mxu0 0.0
    %v425 = vand.u32 %v44, 4294901760
    %426 = vmatpush1.msra.mxu0 %v425
    %427 = vmatprep.subr.mxu0 0.0
    %v428 = vand.u32 %v45, 4294901760
    %429 = vmatpush1.msra.mxu0 %v428
    %430 = vmatprep.subr.mxu0 0.0
    %v431 = vand.u32 %v46, 4294901760
    %432 = vmatpush1.msra.mxu0 %v431
    %433 = vmatprep.subr.mxu0 0.0
    %v434 = vand.u32 %v47, 4294901760
    %435 = vmatpush1.msra.mxu0 %v434
    %436 = vmatprep.subr.mxu0 0.0
    %v437 = vand.u32 %v48, 4294901760
    %438 = vmatpush1.msra.mxu0 %v437
    %439 = vmatprep.subr.mxu0 0.0
    %v440 = vand.u32 %v49, 4294901760
    %441 = vmatpush1.msra.mxu0 %v440
    %442 = vmatprep.subr.mxu0 0.0
    %v443 = vand.u32 %v50, 4294901760
    %444 = vmatpush1.msra.mxu0 %v443
    %445 = vmatprep.subr.mxu0 0.0
    %446 = vmatpush1.msra.mxu0 0.0
    %447 = vmatprep.subr.mxu0 0.0
    %448 = vmatpush1.msra.mxu0 0.0
    %449 = vmatprep.subr.mxu0 0.0
    %450 = vmatpush1.msra.mxu0 0.0
    %451 = vmatprep.subr.mxu0 0.0
    %452 = vmatpush1.msra.mxu0 0.0
    %453 = vmatprep.subr.mxu0 0.0
    %454 = vmatpush1.msra.mxu0 0.0
    %455 = vmatprep.subr.mxu0 0.0
    %456 = vmatpush1.msra.mxu0 0.0
    %457 = vmatprep.subr.mxu0 0.0
    %458 = vmatpush1.msra.mxu0 0.0
    %459 = vmatprep.subr.mxu0 0.0
    %460 = vmatpush1.msra.mxu0 0.0
    %461 = vmatprep.subr.mxu0 0.0
    %462 = vmatpush1.msra.mxu0 0.0
    %463 = vmatprep.subr.mxu0 0.0
    %464 = vmatpush1.msra.mxu0 0.0
    %465 = vmatprep.subr.mxu0 0.0
    %466 = vmatpush1.msra.mxu0 0.0
    %467 = vmatprep.subr.mxu0 0.0
    %468 = vmatpush1.msra.mxu0 0.0
    %469 = vmatprep.subr.mxu0 0.0
    %470 = vmatpush1.msra.mxu0 0.0
    %471 = vmatprep.subr.mxu0 0.0
    %472 = vmatpush1.msra.mxu0 0.0
    %473 = vmatprep.subr.mxu0 0.0
    %474 = vmatpush1.msra.mxu0 0.0
    %475 = vmatprep.subr.mxu0 0.0
    %476 = vmatpush1.msra.mxu0 0.0
    %477 = vmatprep.mubr.f32.mxu0 0.0
    %v478 = vand.u32 %v34, 4294901760
    %v479 = vsub.f32 %v34, %v478
    %v480 = vand.u32 %v479, 4294901760
    %481 = vmatmul.mubr.f32.gmra.mrb[0].mxu0 %v480
    %v482 = vpop.f32.mrb[0].mxu0
    %v483 = vadd.f32 %v394, %v482
    %v484 = vpop.f32.mrb[0].mxu0
    %485 = vdwg.mxu0
    %486 = vmatprep.subr.mxu0 0.0
    %v487 = vand.u32 %v35, 4294901760
    %v488 = vsub.f32 %v35, %v487
    %v489 = vand.u32 %v488, 4294901760
    %490 = vmatpush1.msra.mxu0 %v489
    %491 = vmatprep.subr.mxu0 0.0
    %v492 = vand.u32 %v36, 4294901760
    %v493 = vsub.f32 %v36, %v492
    %v494 = vand.u32 %v493, 4294901760
    %495 = vmatpush1.msra.mxu0 %v494
    %496 = vmatprep.subr.mxu0 0.0
    %v497 = vand.u32 %v37, 4294901760
    %v498 = vsub.f32 %v37, %v497
    %v499 = vand.u32 %v498, 4294901760
    %500 = vmatpush1.msra.mxu0 %v499
    %501 = vmatprep.subr.mxu0 0.0
    %v502 = vand.u32 %v38, 4294901760
    %v503 = vsub.f32 %v38, %v502
    %v504 = vand.u32 %v503, 4294901760
    %505 = vmatpush1.msra.mxu0 %v504
    %506 = vmatprep.subr.mxu0 0.0
    %v507 = vand.u32 %v39, 4294901760
    %v508 = vsub.f32 %v39, %v507
    %v509 = vand.u32 %v508, 4294901760
    %510 = vmatpush1.msra.mxu0 %v509
    %511 = vmatprep.subr.mxu0 0.0
    %v512 = vand.u32 %v40, 4294901760
    %v513 = vsub.f32 %v40, %v512
    %v514 = vand.u32 %v513, 4294901760
    %515 = vmatpush1.msra.mxu0 %v514
    %516 = vmatprep.subr.mxu0 0.0
    %v517 = vand.u32 %v41, 4294901760
    %v518 = vsub.f32 %v41, %v517
    %v519 = vand.u32 %v518, 4294901760
    %520 = vmatpush1.msra.mxu0 %v519
    %521 = vmatprep.subr.mxu0 0.0
    %v522 = vand.u32 %v42, 4294901760
    %v523 = vsub.f32 %v42, %v522
    %v524 = vand.u32 %v523, 4294901760
    %525 = vmatpush1.msra.mxu0 %v524
    %526 = vmatprep.subr.mxu0 0.0
    %v527 = vand.u32 %v43, 4294901760
    %v528 = vsub.f32 %v43, %v527
    %v529 = vand.u32 %v528, 4294901760
    %530 = vmatpush1.msra.mxu0 %v529
    %531 = vmatprep.subr.mxu0 0.0
    %v532 = vand.u32 %v44, 4294901760
    %v533 = vsub.f32 %v44, %v532
    %v534 = vand.u32 %v533, 4294901760
    %535 = vmatpush1.msra.mxu0 %v534
    %536 = vmatprep.subr.mxu0 0.0
    %v537 = vand.u32 %v45, 4294901760
    %v538 = vsub.f32 %v45, %v537
    %v539 = vand.u32 %v538, 4294901760
    %540 = vmatpush1.msra.mxu0 %v539
    %541 = vmatprep.subr.mxu0 0.0
    %v542 = vand.u32 %v46, 4294901760
    %v543 = vsub.f32 %v46, %v542
    %v544 = vand.u32 %v543, 4294901760
    %545 = vmatpush1.msra.mxu0 %v544
    %546 = vmatprep.subr.mxu0 0.0
    %v547 = vand.u32 %v47, 4294901760
    %v548 = vsub.f32 %v47, %v547
    %v549 = vand.u32 %v548, 4294901760
    %550 = vmatpush1.msra.mxu0 %v549
    %551 = vmatprep.subr.mxu0 0.0
    %v552 = vand.u32 %v48, 4294901760
    %v553 = vsub.f32 %v48, %v552
    %v554 = vand.u32 %v553, 4294901760
    %555 = vmatpush1.msra.mxu0 %v554
    %556 = vmatprep.subr.mxu0 0.0
    %v557 = vand.u32 %v49, 4294901760
    %v558 = vsub.f32 %v49, %v557
    %v559 = vand.u32 %v558, 4294901760
    %560 = vmatpush1.msra.mxu0 %v559
    %561 = vmatprep.subr.mxu0 0.0
    %v562 = vand.u32 %v50, 4294901760
    %v563 = vsub.f32 %v50, %v562
    %v564 = vand.u32 %v563, 4294901760
    %565 = vmatpush1.msra.mxu0 %v564
    %566 = vmatprep.subr.mxu0 0.0
    %567 = vmatpush1.msra.mxu0 0.0
    %568 = vmatprep.subr.mxu0 0.0
    %569 = vmatpush1.msra.mxu0 0.0
    %570 = vmatprep.subr.mxu0 0.0
    %571 = vmatpush1.msra.mxu0 0.0
    %572 = vmatprep.subr.mxu0 0.0
    %573 = vmatpush1.msra.mxu0 0.0
    %574 = vmatprep.subr.mxu0 0.0
    %575 = vmatpush1.msra.mxu0 0.0
    %576 = vmatprep.subr.mxu0 0.0
    %577 = vmatpush1.msra.mxu0 0.0
    %578 = vmatprep.subr.mxu0 0.0
    %579 = vmatpush1.msra.mxu0 0.0
    %580 = vmatprep.subr.mxu0 0.0
    %581 = vmatpush1.msra.mxu0 0.0
    %582 = vmatprep.subr.mxu0 0.0
    %583 = vmatpush1.msra.mxu0 0.0
    %584 = vmatprep.subr.mxu0 0.0
    %585 = vmatpush1.msra.mxu0 0.0
    %586 = vmatprep.subr.mxu0 0.0
    %587 = vmatpush1.msra.mxu0 0.0
    %588 = vmatprep.subr.mxu0 0.0
    %589 = vmatpush1.msra.mxu0 0.0
    %590 = vmatprep.subr.mxu0 0.0
    %591 = vmatpush1.msra.mxu0 0.0
    %592 = vmatprep.subr.mxu0 0.0
    %593 = vmatpush1.msra.mxu0 0.0
    %594 = vmatprep.subr.mxu0 0.0
    %595 = vmatpush1.msra.mxu0 0.0
    %596 = vmatprep.subr.mxu0 0.0
    %597 = vmatpush1.msra.mxu0 0.0
    %598 = vmatprep.mubr.f32.mxu0 0.0
    %v599 = vand.u32 %v34, 4294901760
    %600 = vmatmul.mubr.f32.gmra.mrb[0].mxu0 %v599
    %v601 = vpop.f32.mrb[0].mxu0
    %v602 = vadd.f32 %v483, %v601
    %v603 = vpop.f32.mrb[0].mxu0
    %604 = vdwg.mxu0
    %605 = vmatprep.subr.mxu0 0.0
    %v606 = vand.u32 %v35, 4294901760
    %607 = vmatpush1.msra.mxu0 %v606
    %608 = vmatprep.subr.mxu0 0.0
    %v609 = vand.u32 %v36, 4294901760
    %610 = vmatpush1.msra.mxu0 %v609
    %611 = vmatprep.subr.mxu0 0.0
    %v612 = vand.u32 %v37, 4294901760
    %613 = vmatpush1.msra.mxu0 %v612
    %614 = vmatprep.subr.mxu0 0.0
    %v615 = vand.u32 %v38, 4294901760
    %616 = vmatpush1.msra.mxu0 %v615
    %617 = vmatprep.subr.mxu0 0.0
    %v618 = vand.u32 %v39, 4294901760
    %619 = vmatpush1.msra.mxu0 %v618
    %620 = vmatprep.subr.mxu0 0.0
    %v621 = vand.u32 %v40, 4294901760
    %622 = vmatpush1.msra.mxu0 %v621
    %623 = vmatprep.subr.mxu0 0.0
    %v624 = vand.u32 %v41, 4294901760
    %625 = vmatpush1.msra.mxu0 %v624
    %626 = vmatprep.subr.mxu0 0.0
    %v627 = vand.u32 %v42, 4294901760
    %628 = vmatpush1.msra.mxu0 %v627
    %629 = vmatprep.subr.mxu0 0.0
    %v630 = vand.u32 %v43, 4294901760
    %631 = vmatpush1.msra.mxu0 %v630
    %632 = vmatprep.subr.mxu0 0.0
    %v633 = vand.u32 %v44, 4294901760
    %634 = vmatpush1.msra.mxu0 %v633
    %635 = vmatprep.subr.mxu0 0.0
    %v636 = vand.u32 %v45, 4294901760
    %637 = vmatpush1.msra.mxu0 %v636
    %638 = vmatprep.subr.mxu0 0.0
    %v639 = vand.u32 %v46, 4294901760
    %640 = vmatpush1.msra.mxu0 %v639
    %641 = vmatprep.subr.mxu0 0.0
    %v642 = vand.u32 %v47, 4294901760
    %643 = vmatpush1.msra.mxu0 %v642
    %644 = vmatprep.subr.mxu0 0.0
    %v645 = vand.u32 %v48, 4294901760
    %646 = vmatpush1.msra.mxu0 %v645
    %647 = vmatprep.subr.mxu0 0.0
    %v648 = vand.u32 %v49, 4294901760
    %649 = vmatpush1.msra.mxu0 %v648
    %650 = vmatprep.subr.mxu0 0.0
    %v651 = vand.u32 %v50, 4294901760
    %652 = vmatpush1.msra.mxu0 %v651
    %653 = vmatprep.subr.mxu0 0.0
    %654 = vmatpush1.msra.mxu0 0.0
    %655 = vmatprep.subr.mxu0 0.0
    %656 = vmatpush1.msra.mxu0 0.0
    %657 = vmatprep.subr.mxu0 0.0
    %658 = vmatpush1.msra.mxu0 0.0
    %659 = vmatprep.subr.mxu0 0.0
    %660 = vmatpush1.msra.mxu0 0.0
    %661 = vmatprep.subr.mxu0 0.0
    %662 = vmatpush1.msra.mxu0 0.0
    %663 = vmatprep.subr.mxu0 0.0
    %664 = vmatpush1.msra.mxu0 0.0
    %665 = vmatprep.subr.mxu0 0.0
    %666 = vmatpush1.msra.mxu0 0.0
    %667 = vmatprep.subr.mxu0 0.0
    %668 = vmatpush1.msra.mxu0 0.0
    %669 = vmatprep.subr.mxu0 0.0
    %670 = vmatpush1.msra.mxu0 0.0
    %671 = vmatprep.subr.mxu0 0.0
    %672 = vmatpush1.msra.mxu0 0.0
    %673 = vmatprep.subr.mxu0 0.0
    %674 = vmatpush1.msra.mxu0 0.0
    %675 = vmatprep.subr.mxu0 0.0
    %676 = vmatpush1.msra.mxu0 0.0
    %677 = vmatprep.subr.mxu0 0.0
    %678 = vmatpush1.msra.mxu0 0.0
    %679 = vmatprep.subr.mxu0 0.0
    %680 = vmatpush1.msra.mxu0 0.0
    %681 = vmatprep.subr.mxu0 0.0
    %682 = vmatpush1.msra.mxu0 0.0
    %683 = vmatprep.subr.mxu0 0.0
    %684 = vmatpush1.msra.mxu0 0.0
    %685 = vmatprep.mubr.f32.mxu0 0.0
    %v686 = vand.u32 %v34, 4294901760
    %687 = vmatmul.mubr.f32.gmra.mrb[0].mxu0 %v686
    %v688 = vpop.f32.mrb[0].mxu0
    %v689 = vadd.f32 %v602, %v688
    %v690 = vpop.f32.mrb[0].mxu0
    %691 = vdwg.mxu0
    %692 = vst [vmem:[#allocation5] sm:$0xff] %v689
    // Predicated region
    $region14: #{tpu_custom_call.1} parent=1 // pred_check
      _
    $region15: #{tpu_custom_call.1} parent=1 // pred_check_branch
      %694 = sbr.rel (0) target = $region17
    $region16: #{tpu_custom_call.1} parent=1 // pred_region
      %s696 = ssub.s32 128, 128
      %697 = vsyncadd [#allocation4], %s696
      %s699 = sshll.u32 [#allocation5], 4
      %s700 = int_to_ptr.vmem [resolvable:$true] %s699
      %702 = dma.vmem_to_hbm [thread:$0]  %s700, 128, %s2, [#allocation4]
    $region17: #{tpu_custom_call.1} parent=1 // pred_fallthru
      _
    // Predicated region
    $region18: #{tpu_custom_call.1} parent=1 // pred_check
      _
    $region19: #{tpu_custom_call.1} parent=1 // pred_check_branch
      %704 = sbr.rel (0) target = $region21
    $region20: #{tpu_custom_call.1} parent=1 // pred_region
      %705 = dma.done [#allocation4], 128
    $region21: #{tpu_custom_call.1} parent=1 // pred_fallthru
      _
    %706 = vsyncpa [#allocation3], 1
    %707 = vsyncpa [#allocation4], 1

</llo_original>
